<compile_context>
chip_gen: v5e
topology: v5e:2x2
jax: 0.10.0
libtpu: 0.0.40
codegen_flags: <defaults>
</compile_context>

<pallas_src>
import functools

import jax
import jax.numpy as jnp
from jax.experimental import pallas as pl
from jax.experimental.pallas import tpu as pltpu


_MIN_GRID_STEPS = 4                      # feed both v7x TensorCores + pipeline overlap
_DEFAULT_VMEM_CAPACITY = 64 * 1024 * 1024  # conservative fallback: v7x per-TC VMEM


def _detect_vmem_capacity():
    try:
        cap = int(pltpu.get_tpu_info().vmem_capacity_bytes)
        if cap > 0:
            return cap
    except Exception:
        pass
    return _DEFAULT_VMEM_CAPACITY


_VMEM_CAPACITY = _detect_vmem_capacity()


def _vmem_budget():
    """(vmem_limit_bytes for the compiler, tile-selection budget) — generation aware."""
    limit = min((_VMEM_CAPACITY * 3) // 4, 96 * 1024 * 1024)   # 96 MiB on 128-MiB parts, 48 MiB on v7x
    budget = (limit * 4) // 5                                   # headroom for scratch/stack/spills
    return limit, budget


def _tile_bytes(tn, C, D, return_distances, dist_itemsize, bf16_mm):
    """Conservative per-grid-step VMEM footprint, INCLUDING kernel-body temporaries."""
    f32 = 4
    b = 2 * D * tn * f32                         # x input tile (double-buffered)
    b += 2 * D * tn * f32                        # quantized output tile
    b += 2 * 8 * tn * 4                          # index output tile (sublane-padded int32)
    b += 2 * C * D * f32                         # codebook (grid-invariant, still 2 buffers)
    # in-kernel temporaries: xe / score / iota / one-hot (+ d2, dist, transposed dist)
    n_tmp = 4 + (3 if return_distances else 0)
    b += n_tmp * C * tn * f32
    if bf16_mm:
        b += (C * D + D * tn) * 2                # bf16 staging copies of e and x
    if return_distances:
        b += 2 * C * tn * dist_itemsize          # distances output tile
    b += 256 * 1024                              # sse / ||e||^2 / padding / misc slack
    return b


def _choose_tile_n(B, N, C, D, return_distances, dist_itemsize, bf16_mm,
                   max_tile_n, budget):
    """Largest N tile (multiple of 128 dividing N) that fits the VMEM budget while still
    giving >= _MIN_GRID_STEPS grid points (megacore / pipeline feeding)."""
    limit = min(N, max_tile_n)
    cands = [tn for tn in range(128, limit + 1, 128) if N % tn == 0]
    if not cands:
        return N                                 # small / oddly-sized N: one tile
    fitting = [tn for tn in cands
               if _tile_bytes(tn, C, D, return_distances, dist_itemsize, bf16_mm) <= budget]
    if not fitting:
        return cands[0]                          # best effort: smallest candidate
    preferred = [tn for tn in fitting if (N // tn) * B >= _MIN_GRID_STEPS]
    if preferred:
        return max(preferred)
    return min(fitting)                          # cannot reach target: maximize grid steps


def _vq_kernel(x_ref, e_ref, *out_refs, return_distances, dist_lane_c,
               bf16_distance_matmul, dist_dtype):
    """Per-(batch, N-tile) VQ hot path: distances, argmin, one-hot gather, SSE partial.

    x_ref:    (1, D, TN) f32  input tile (channels-first, N tile in the lane dim)
    e_ref:    (1, C, D)  f32  codebook (grid-invariant block)
    q_ref:    (1, D, TN) f32  quantized output tile (channels-first, lane-dense)
    idx_ref:  (1, 1, TN) i32  nearest-code indices
    dist_ref: (1, TN, C) if dist_lane_c else (1, C, TN)   negative euclidean distances
    sse_ref:  (1, 1, 1, 1) f32 per-(batch, tile) sum of squared error
    """
    if return_distances:
        q_ref, idx_ref, dist_ref, sse_ref = out_refs
    else:
        q_ref, idx_ref, sse_ref = out_refs
        dist_ref = None

    x = x_ref[0]                                       # (D, TN) f32
    e = e_ref[0]                                       # (C, D)  f32
    C = e.shape[0]

    # ||e||^2 recomputed from the resident codebook: VPU/XLU work that hides under the
    # MXU matmul and removes a padded (C, 1) input stream + its double buffer.
    e2 = jnp.sum(e * e, axis=1, keepdims=True)         # (C, 1)

    # x.e on the MXU, laid out (C, TN) so the N tile stays in the lane dimension.
    if bf16_distance_matmul:
        xe = jnp.dot(e.astype(jnp.bfloat16), x.astype(jnp.bfloat16),
                     preferred_element_type=jnp.float32)          # (C, TN)
    else:
        xe = jnp.dot(e, x, preferred_element_type=jnp.float32)    # (C, TN)

    # argmax(-cdist) == argmin(||x-e||^2) == argmin(e2 - 2 x.e)   (x^2 constant per position)
    score = e2 - 2.0 * xe                                          # (C, TN)
    minv = jnp.min(score, axis=0, keepdims=True)                   # (1, TN)
    iota_c = jax.lax.broadcasted_iota(jnp.int32, score.shape, 0)   # (C, TN)
    idx2d = jnp.min(jnp.where(score == minv, iota_c, C), axis=0,
                    keepdims=True).astype(jnp.int32)               # (1, TN) first match

    # Exact codebook gather via f32 one-hot matmul -> (D, TN), lane-dense in the N tile.
    one_hot = (iota_c == idx2d).astype(jnp.float32)                # (C, TN)
    quant = jax.lax.dot_general(e, one_hot, (((0,), (0,)), ((), ())),
                                preferred_element_type=jnp.float32)  # (D, TN)

    # Partial sum of squared error for the commitment loss.
    diff = quant - x
    sse = jnp.sum(jnp.sum(diff * diff, axis=0, keepdims=True),
                  axis=1, keepdims=True)                           # (1, 1)

    q_ref[...] = quant[None]
    idx_ref[...] = idx2d[None]
    sse_ref[...] = sse[None, None]

    if return_distances:
        x2 = jnp.sum(x * x, axis=0, keepdims=True)                 # (1, TN)
        d2 = jnp.maximum(x2 + score, 0.0)                          # ||x - e||^2, clamped
        dist = -jnp.sqrt(d2)                                       # (C, TN)
        if dist_lane_c:
            # In-kernel XLU transpose -> lane-dense (TN, C) store; no wrapper transpose.
            dist_ref[...] = jnp.transpose(dist, (1, 0)).astype(dist_dtype)[None]
        else:
            dist_ref[...] = dist.astype(dist_dtype)[None]


@functools.partial(
    jax.jit,
    static_argnames=("commitment_cost", "return_distances", "bf16_distance_matmul",
                     "distances_dtype", "max_tile_n"))
def vector_quantizer_forward(x_bdn, embedding, commitment_cost=0.25,
                             return_distances=True,
                             bf16_distance_matmul=True,
                             distances_dtype=jnp.float32,
                             max_tile_n=2048):
    """Mirrors VectorQuantizer.forward (eval path, cos_sim=False).

    x_bdn:     (B, D, N) float32  -- the module's native channels-first input
    embedding: (1, C, D) float32  -- codebook parameter

    Returns (quantized (B, D, N), encoding_indices (B, N) int32, loss scalar,
             distances (B, N, C) or None when return_distances=False).
    """
    B, D, N = x_bdn.shape
    _, C, D2 = embedding.shape
    assert D == D2

    x = x_bdn.astype(jnp.float32)              # consumed channels-first: no input transpose
    emb = embedding.astype(jnp.float32)        # (1, C, D)

    dist_dtype = jnp.dtype(distances_dtype)
    dist_lane_c = bool(return_distances and (C % 128 == 0))

    vmem_limit, vmem_budget = _vmem_budget()
    TN = _choose_tile_n(B, N, C, D, return_distances, dist_dtype.itemsize,
                        bf16_distance_matmul, max_tile_n, vmem_budget)
    NT = N // TN if N % TN == 0 else 1

    out_shapes = [
        jax.ShapeDtypeStruct((B, D, N), jnp.float32),     # quantized (channels-first)
        jax.ShapeDtypeStruct((B, 1, N), jnp.int32),       # indices
    ]
    out_specs = [
        pl.BlockSpec((1, D, TN), lambda b, t: (b, 0, t)),
        pl.BlockSpec((1, 1, TN), lambda b, t: (b, 0, t)),
    ]
    if return_distances:
        if dist_lane_c:
            # Lane-dense (B, N, C): written transposed in-kernel, no wrapper transpose.
            out_shapes.append(jax.ShapeDtypeStruct((B, N, C), dist_dtype))
            out_specs.append(pl.BlockSpec((1, TN, C), lambda b, t: (b, t, 0)))
        else:
            # Small / non-128-multiple C: keep N lane-dense, cheap transpose in wrapper.
            out_shapes.append(jax.ShapeDtypeStruct((B, C, N), dist_dtype))
            out_specs.append(pl.BlockSpec((1, C, TN), lambda b, t: (b, 0, t)))
    out_shapes.append(jax.ShapeDtypeStruct((B, NT, 1, 1), jnp.float32))   # per-(b, tile) SSE
    out_specs.append(pl.BlockSpec((1, 1, 1, 1), lambda b, t: (b, t, 0, 0)))

    kernel = functools.partial(_vq_kernel,
                               return_distances=return_distances,
                               dist_lane_c=dist_lane_c,
                               bf16_distance_matmul=bf16_distance_matmul,
                               dist_dtype=dist_dtype)

    results = pl.pallas_call(
        kernel,
        out_shape=tuple(out_shapes),
        grid=(B, NT),
        in_specs=[
            pl.BlockSpec((1, D, TN), lambda b, t: (b, 0, t)),   # x tile
            pl.BlockSpec((1, C, D), lambda b, t: (0, 0, 0)),    # codebook (grid-invariant)
        ],
        out_specs=tuple(out_specs),
        compiler_params=pltpu.CompilerParams(
            dimension_semantics=("parallel", "parallel"),
            vmem_limit_bytes=vmem_limit),
    )(x, emb)

    if return_distances:
        quantized, idx, dist_raw, sse = results
        if dist_lane_c:
            distances = dist_raw                              # already (B, N, C)
        else:
            distances = jnp.transpose(dist_raw, (0, 2, 1))    # tiny tensor when C is small
    else:
        quantized, idx, sse = results
        distances = None

    commit_loss = jnp.sum(sse) / float(B * N * D)             # F.mse_loss (mean over elems)
    loss = commitment_cost * commit_loss                      # vq_loss == 0 in the module
    encoding_indices = idx.reshape(B, N)
    return quantized, encoding_indices, loss, distances


def init_embedding(key, num_embeddings, embedding_dim):
    """Deterministic stand-in for init_embed_ (kaiming_uniform_ on a fresh codebook)."""
    bound = jnp.sqrt(6.0 / embedding_dim)                      # kaiming uniform, fan_in = D
    return jax.random.uniform(
        key, (1, num_embeddings, embedding_dim),
        minval=-bound, maxval=bound, dtype=jnp.float32)


if __name__ == "__main__":
    # Small shapes consistent with the module: (batch, embedding_dim, seq)
    B, D, N = 2, 32, 256
    commitment_cost = 0.25

    key = jax.random.PRNGKey(0)
    k_x, k_e = jax.random.split(key)
    x = jax.random.normal(k_x, (B, D, N), dtype=jnp.float32)

    def reference(x_bdn, embedding):
        """Pure-JAX mirror of the PyTorch eval path."""
        x_bnd = jnp.transpose(x_bdn, (0, 2, 1))                               # (B, N, D)
        e = embedding[0]                                                      # (C, D)
        d2 = jnp.sum((x_bnd[:, :, None, :] - e[None, None, :, :]) ** 2, axis=-1)
        dist = -jnp.sqrt(d2)                                                  # (B, N, C)
        idx = jnp.argmax(dist, axis=-1).astype(jnp.int32)
        quant_bnd = e[idx]
        loss = commitment_cost * jnp.mean((quant_bnd - x_bnd) ** 2)
        return jnp.transpose(quant_bnd, (0, 2, 1)), idx, loss, dist, d2

    # C=16 exercises the small-codebook path (distances kept (B, C, N) in-kernel, tiny
    # wrapper transpose); C=128 exercises the lane-dense, in-kernel-transposed (B, N, C) path.
    for num_embeddings in (16, 128):
        emb = init_embedding(jax.random.fold_in(k_e, num_embeddings), num_embeddings, D)
        ref_q, ref_idx, ref_loss, ref_dist, ref_d2 = reference(x, emb)
        best_d2 = jnp.min(ref_d2, axis=-1)

        # Default fast path: bf16 distance matmul, distances requested (multi-tile: TN=128).
        q, idx, loss, dist = vector_quantizer_forward(x, emb, commitment_cost=commitment_cost)
        jax.block_until_ready((q, idx, loss, dist))
        assert q.shape == (B, D, N) and idx.shape == (B, N) and loss.shape == ()
        assert dist.shape == (B, N, num_embeddings)
        # bf16 scores may flip near-exact ties vs the exact reference argmin; require the
        # chosen code to be (near-)optimal and quantized to be the exact row for that choice.
        chosen_d2 = jnp.take_along_axis(ref_d2, idx[..., None], axis=-1)[..., 0]
        assert bool(jnp.all(chosen_d2 <= best_d2 + 1e-2 * (1.0 + best_d2)))
        gathered = jnp.transpose(emb[0][idx], (0, 2, 1))
        assert bool(jnp.allclose(q, gathered, atol=1e-3, rtol=1e-3))
        assert bool(jnp.allclose(dist, ref_dist, atol=5e-3, rtol=5e-3))
        assert bool(jnp.allclose(loss, ref_loss, atol=2e-4, rtol=2e-3))

        # Exact path: f32 distance matmul must reproduce the reference argmax exactly.
        q32, idx32, loss32, dist32 = vector_quantizer_forward(
            x, emb, commitment_cost=commitment_cost, bf16_distance_matmul=False)
        jax.block_until_ready((q32, idx32, loss32, dist32))
        assert int(jnp.sum(idx32 != ref_idx)) == 0
        assert bool(jnp.allclose(q32, ref_q, atol=2e-3, rtol=2e-3))
        assert bool(jnp.allclose(dist32, ref_dist, atol=5e-3, rtol=5e-3))
        assert bool(jnp.allclose(loss32, ref_loss, atol=1e-4, rtol=2e-3))

        # No-distances + forced multi-tile variant.
        q_nd, idx_nd, loss_nd, dist_nd = vector_quantizer_forward(
            x, emb, commitment_cost=commitment_cost, return_distances=False,
            bf16_distance_matmul=False, max_tile_n=128)
        jax.block_until_ready((q_nd, idx_nd, loss_nd))
        assert dist_nd is None
        assert int(jnp.sum(idx_nd != ref_idx)) == 0
        assert bool(jnp.allclose(q_nd, ref_q, atol=2e-3, rtol=2e-3))
        assert bool(jnp.allclose(loss_nd, ref_loss, atol=1e-4, rtol=2e-3))

    print("KERNEL_OK")
</pallas_src>

<mosaic_0001>
module attributes {stable_mosaic.version = 11 : i64} {
  func.func @_vq_kernel(%arg0: i32, %arg1: i32, %arg2: memref<1x32x128xf32, #tpu.memory_space<vmem>>, %arg3: memref<1x16x32xf32, #tpu.memory_space<vmem>>, %arg4: memref<1x32x128xf32, #tpu.memory_space<vmem>>, %arg5: memref<1x1x128xi32, #tpu.memory_space<vmem>>, %arg6: memref<1x16x128xf32, #tpu.memory_space<vmem>>, %arg7: memref<1x1x1x1xf32, #tpu.memory_space<vmem>>) attributes {dimension_semantics = [#tpu.dimension_semantics<parallel>, #tpu.dimension_semantics<parallel>], iteration_bounds = array<i64: 2, 2>, scalar_prefetch = 0 : i64, scratch_operands = 0 : i64, tpu.core_type = #tpu.core_type<tc>, window_params = [{transform_indices = @transform_0, window_bounds = array<i64: 1, 32, 128>}, {pipeline_mode = #tpu.pipeline_mode<synchronous>, transform_indices = @transform_1, window_bounds = array<i64: 1, 16, 32>}, {transform_indices = @transform_2, window_bounds = array<i64: 1, 32, 128>}, {transform_indices = @transform_3, window_bounds = array<i64: 1, 1, 128>}, {transform_indices = @transform_4, window_bounds = array<i64: 1, 16, 128>}, {transform_indices = @transform_5, window_bounds = array<i64: 1, 1, 1, 1>}]} {
    %c0 = arith.constant 0 : index
    %c0_0 = arith.constant 0 : index
    %c0_1 = arith.constant 0 : index
    %0 = vector.load %arg2[%c0, %c0_0, %c0_1] : memref<1x32x128xf32, #tpu.memory_space<vmem>>, vector<1x32x128xf32>
    %1 = vector.shape_cast %0 : vector<1x32x128xf32> to vector<32x128xf32>
    %c0_2 = arith.constant 0 : index
    %c0_3 = arith.constant 0 : index
    %c0_4 = arith.constant 0 : index
    %2 = vector.load %arg3[%c0_2, %c0_3, %c0_4] : memref<1x16x32xf32, #tpu.memory_space<vmem>>, vector<1x16x32xf32>
    %3 = vector.shape_cast %2 : vector<1x16x32xf32> to vector<16x32xf32>
    %4 = arith.mulf %3, %3 : vector<16x32xf32>
    %cst = arith.constant dense<0.000000e+00> : vector<16xf32>
    %5 = vector.multi_reduction <add>, %4, %cst [1] : vector<16x32xf32> to vector<16xf32>
    %6 = vector.shape_cast %5 : vector<16xf32> to vector<16x1xf32>
    %7 = arith.truncf %3 : vector<16x32xf32> to vector<16x32xbf16>
    %8 = arith.truncf %1 : vector<32x128xf32> to vector<32x128xbf16>
    %cst_5 = arith.constant dense<0.000000e+00> : vector<16x128xf32>
    %9 = tpu.matmul %7, %8, %cst_5 {dimension_numbers = #tpu.dot_dimension_numbers<[1], [0], [0], [1], [0, 0, 1, 1], [], []>} : vector<16x32xbf16>, vector<32x128xbf16>, vector<16x128xf32> -> vector<16x128xf32>
    %cst_6 = arith.constant 2.000000e+00 : f32
    %10 = vector.broadcast %cst_6 : f32 to vector<16x128xf32>
    %11 = arith.mulf %10, %9 : vector<16x128xf32>
    %12 = vector.broadcast %6 : vector<16x1xf32> to vector<16x128xf32>
    %13 = arith.subf %12, %11 : vector<16x128xf32>
    %cst_7 = arith.constant dense<0x7F800000> : vector<128xf32>
    %14 = vector.multi_reduction <minimumf>, %13, %cst_7 [0] : vector<16x128xf32> to vector<128xf32>
    %15 = vector.shape_cast %14 : vector<128xf32> to vector<1x128xf32>
    %16 = tpu.iota {dimensions = array<i32: 0>} : vector<16x128xi32>
    %17 = vector.broadcast %15 : vector<1x128xf32> to vector<16x128xf32>
    %18 = arith.cmpf oeq, %13, %17 : vector<16x128xf32>
    %c16_i32 = arith.constant 16 : i32
    %19 = vector.broadcast %c16_i32 : i32 to vector<16x128xi32>
    %20 = arith.select %18, %16, %19 : vector<16x128xi1>, vector<16x128xi32>
    %cst_8 = arith.constant dense<2147483647> : vector<128xi32>
    %21 = vector.multi_reduction <minsi>, %20, %cst_8 [0] : vector<16x128xi32> to vector<128xi32>
    %22 = vector.shape_cast %21 : vector<128xi32> to vector<1x128xi32>
    %23 = vector.broadcast %22 : vector<1x128xi32> to vector<16x128xi32>
    %24 = arith.cmpi eq, %16, %23 : vector<16x128xi32>
    %25 = arith.extui %24 : vector<16x128xi1> to vector<16x128xi32>
    %26 = arith.sitofp %25 : vector<16x128xi32> to vector<16x128xf32>
    %cst_9 = arith.constant dense<0.000000e+00> : vector<32x128xf32>
    %27 = tpu.matmul %3, %26, %cst_9 {dimension_numbers = #tpu.dot_dimension_numbers<[0], [0], [1], [1], [0, 1, 1, 1], [], []>} : vector<16x32xf32>, vector<16x128xf32>, vector<32x128xf32> -> vector<32x128xf32>
    %28 = arith.subf %27, %1 : vector<32x128xf32>
    %29 = arith.mulf %28, %28 : vector<32x128xf32>
    %cst_10 = arith.constant dense<0.000000e+00> : vector<128xf32>
    %30 = vector.multi_reduction <add>, %29, %cst_10 [0] : vector<32x128xf32> to vector<128xf32>
    %31 = vector.shape_cast %30 : vector<128xf32> to vector<1x128xf32>
    %cst_11 = arith.constant dense<0.000000e+00> : vector<1xf32>
    %32 = vector.multi_reduction <add>, %31, %cst_11 [1] : vector<1x128xf32> to vector<1xf32>
    %33 = vector.shape_cast %32 : vector<1xf32> to vector<1x1xf32>
    %34 = vector.shape_cast %27 : vector<32x128xf32> to vector<1x32x128xf32>
    %c0_12 = arith.constant 0 : index
    %c0_13 = arith.constant 0 : index
    %c0_14 = arith.constant 0 : index
    %35 = vector.load %arg4[%c0_12, %c0_13, %c0_14] : memref<1x32x128xf32, #tpu.memory_space<vmem>>, vector<1x32x128xf32>
    tpu.vector_store %arg4[%c0_12, %c0_13, %c0_14], %34 {strides = array<i32>} : memref<1x32x128xf32, #tpu.memory_space<vmem>>, vector<1x32x128xf32>,
    %36 = vector.shape_cast %22 : vector<1x128xi32> to vector<1x1x128xi32>
    %c0_15 = arith.constant 0 : index
    %c0_16 = arith.constant 0 : index
    %c0_17 = arith.constant 0 : index
    %37 = vector.load %arg5[%c0_15, %c0_16, %c0_17] : memref<1x1x128xi32, #tpu.memory_space<vmem>>, vector<1x1x128xi32>
    tpu.vector_store %arg5[%c0_15, %c0_16, %c0_17], %36 {strides = array<i32>} : memref<1x1x128xi32, #tpu.memory_space<vmem>>, vector<1x1x128xi32>,
    %38 = vector.shape_cast %33 : vector<1x1xf32> to vector<1x1x1x1xf32>
    %c0_18 = arith.constant 0 : index
    %c0_19 = arith.constant 0 : index
    %c0_20 = arith.constant 0 : index
    %c0_21 = arith.constant 0 : index
    %39 = vector.load %arg7[%c0_18, %c0_19, %c0_20, %c0_21] : memref<1x1x1x1xf32, #tpu.memory_space<vmem>>, vector<1x1x1x1xf32>
    tpu.vector_store %arg7[%c0_18, %c0_19, %c0_20, %c0_21], %38 {strides = array<i32>} : memref<1x1x1x1xf32, #tpu.memory_space<vmem>>, vector<1x1x1x1xf32>,
    %40 = arith.mulf %1, %1 : vector<32x128xf32>
    %cst_22 = arith.constant dense<0.000000e+00> : vector<128xf32>
    %41 = vector.multi_reduction <add>, %40, %cst_22 [0] : vector<32x128xf32> to vector<128xf32>
    %42 = vector.shape_cast %41 : vector<128xf32> to vector<1x128xf32>
    %43 = vector.broadcast %42 : vector<1x128xf32> to vector<16x128xf32>
    %44 = arith.addf %43, %13 : vector<16x128xf32>
    %cst_23 = arith.constant 0.000000e+00 : f32
    %45 = vector.broadcast %cst_23 : f32 to vector<16x128xf32>
    %46 = arith.maximumf %44, %45 : vector<16x128xf32>
    %47 = math.sqrt %46 : vector<16x128xf32>
    %cst_24 = arith.constant 0.000000e+00 : f32
    %48 = vector.broadcast %cst_24 : f32 to vector<16x128xf32>
    %49 = arith.subf %48, %47 : vector<16x128xf32>
    %50 = vector.shape_cast %49 : vector<16x128xf32> to vector<1x16x128xf32>
    %c0_25 = arith.constant 0 : index
    %c0_26 = arith.constant 0 : index
    %c0_27 = arith.constant 0 : index
    %51 = vector.load %arg6[%c0_25, %c0_26, %c0_27] : memref<1x16x128xf32, #tpu.memory_space<vmem>>, vector<1x16x128xf32>
    tpu.vector_store %arg6[%c0_25, %c0_26, %c0_27], %50 {strides = array<i32>} : memref<1x16x128xf32, #tpu.memory_space<vmem>>, vector<1x16x128xf32>,
    return
  }
  func.func @transform_0(%arg0: i32, %arg1: i32) -> (i32, i32, i32) {
    %c0_i32 = arith.constant 0 : i32
    %c0_i32_0 = arith.constant 0 : i32
    return %arg0, %c0_i32, %arg1 : i32, i32, i32
  }
  func.func @transform_1(%arg0: i32, %arg1: i32) -> (i32, i32, i32) {
    %c0_i32 = arith.constant 0 : i32
    %c0_i32_0 = arith.constant 0 : i32
    %c0_i32_1 = arith.constant 0 : i32
    %c0_i32_2 = arith.constant 0 : i32
    return %c0_i32, %c0_i32_0, %c0_i32_1 : i32, i32, i32
  }
  func.func @transform_2(%arg0: i32, %arg1: i32) -> (i32, i32, i32) {
    %c0_i32 = arith.constant 0 : i32
    %c0_i32_0 = arith.constant 0 : i32
    return %arg0, %c0_i32, %arg1 : i32, i32, i32
  }
  func.func @transform_3(%arg0: i32, %arg1: i32) -> (i32, i32, i32) {
    %c0_i32 = arith.constant 0 : i32
    %c0_i32_0 = arith.constant 0 : i32
    return %arg0, %c0_i32, %arg1 : i32, i32, i32
  }
  func.func @transform_4(%arg0: i32, %arg1: i32) -> (i32, i32, i32) {
    %c0_i32 = arith.constant 0 : i32
    %c0_i32_0 = arith.constant 0 : i32
    return %arg0, %c0_i32, %arg1 : i32, i32, i32
  }
  func.func @transform_5(%arg0: i32, %arg1: i32) -> (i32, i32, i32, i32) {
    %c0_i32 = arith.constant 0 : i32
    %c0_i32_0 = arith.constant 0 : i32
    %c0_i32_1 = arith.constant 0 : i32
    return %arg0, %arg1, %c0_i32, %c0_i32_0 : i32, i32, i32, i32
  }
}

</mosaic_0001>

<llo_original>
// kernel: vector_quantizer_forward.1
$region0: #{vector_quantizer_forward.1}
  #allocation0 [shape = 'u32[]', space=smem, size = 0x4, offset = 0x4, fixed_abs, tag = 'smem constant byte address 0x4 - core index']
  #allocation1 [shape = 'u32[72,128]{1,0:T(1,128)}', space=vmem, size = 0x9000, scoped, tag = 'internal scratch']
  %s0 = inlined_call_operand.hbm [shape: f32[2,32,256], index: 0, kind: input, shape index: {}]
  %s1 = inlined_call_operand.hbm [shape: f32[1,16,32], index: 1, kind: input, shape index: {}]
  %s2 = inlined_call_operand.hbm [shape: f32[2,32,256], index: 2, kind: output, shape index: {0}]
  %s3 = inlined_call_operand.vmem [shape: s32[2,1,256], index: 3, kind: output, shape index: {1}]
  %s4 = inlined_call_operand.hbm [shape: f32[2,16,256], index: 4, kind: output, shape index: {2}]
  %s5 = inlined_call_operand.vmem [shape: f32[2,2,1,1], index: 5, kind: output, shape index: {3}]
  %6 = xla_tuple %s2, %s3, %s4, %s5
  %s7 = sld [smem:[#allocation0]]
  $region73: #{vector_quantizer_forward.1} parent=0
    _
  %s9 = ssub.s32 1, %s7
  %s10 = scalar_select 0, %s9, %s7
  $region1: #{vector_quantizer_forward.1} parent=0
    #allocation2 [shape = 'u8[32768]{0}', space=vmem, size = 0x8000, scoped, tag = 'input window, operand 0']
    #allocation3 [shape = 's32[2]{0}', space=sflag, size = 0x8, scoped, tag = 'scoped memory for vector_quantizer_forward.1']
    #allocation4 [shape = 's32[2]{0}', space=sflag, size = 0x8, scoped, tag = 'scoped memory for vector_quantizer_forward.1']
    #allocation5 [shape = 'u8[8192]{0}', space=vmem, size = 0x2000, scoped, tag = 'input window, operand 1, single buffered']
    #allocation6 [shape = 's32[1]{0}', space=sflag, size = 0x4, scoped, tag = 'scoped memory for vector_quantizer_forward.1']
    #allocation7 [shape = 'u8[32768]{0}', space=vmem, size = 0x8000, scoped, tag = 'output window, operand 0']
    #allocation8 [shape = 'u8[16384]{0}', space=vmem, size = 0x4000, scoped, tag = 'output window, operand 2']
    #allocation9 [shape = 's32[2]{0}', space=sflag, size = 0x8, scoped, tag = 'scoped memory for vector_quantizer_forward.1']
    %11 = vsyncpa [#allocation3], 0
    %s12 = scalar_lea.sflag [#allocation3], 1
    %13 = vsyncpa %s12, 0
    %14 = vsyncpa [#allocation6], 0
    %15 = vsyncpa [#allocation4], 0
    %s16 = scalar_lea.sflag [#allocation4], 1
    %17 = vsyncpa %s16, 0
    %18 = vsyncpa [#allocation9], 0
    %s19 = scalar_lea.sflag [#allocation9], 1
    %20 = vsyncpa %s19, 0
    loop: start=0, step=1, limit=6
    $region2: #{vector_quantizer_forward.1} parent=1 // loop_pre_header
      _
    $region3: #{vector_quantizer_forward.1} parent=1 // loop_header
      %s22 = sphi 0, %s26
      %p23 = scmp.ge.s32.totalorder %s22, 6
      %s29 = sphi 0, %s41
      %s30 = sphi 0, %s37
      %s31 = sphi 0, %s29
      %s32 = sphi 0, %s30
      %s33 = sphi 0, %s31
      %s34 = sphi 0, %s32
      %s46 = sphi 0, %s48
      %s49 = sphi 0, %s46
      %s50 = sphi 0, %s49
      %s66 = sphi 0, %s50
      %s70 = sphi 0, %s70
      %s72 = sphi 0, %s70
      %s73 = sphi 0, %s72
      %s87 = sphi 0, %s73
      %s95 = sphi 0, %s97
      %s98 = sphi 0, %s95
      %s99 = sphi 0, %s98
      %s115 = sphi 0, %s99
      %s123 = sphi 0, %s125
      %s126 = sphi 0, %s123
      %s127 = sphi 0, %s126
      %s143 = sphi 0, %s127
      %s151 = sphi 0, %s153
      %s154 = sphi 0, %s151
      %s155 = sphi 0, %s154
      %s171 = sphi 0, %s155
      %s179 = sphi 0, %s181
      %s182 = sphi 0, %s179
      %s183 = sphi 0, %s182
      %s199 = sphi 0, %s183
    $region4: #{vector_quantizer_forward.1} parent=1 // loop_header_branch
      %25 = sbr.rel (%p23) target = $region8
    $region5: #{vector_quantizer_forward.1} parent=1 // loop_body
      %s27 = ssub.s32 %s22, 1
      %s28 = ssub.s32 %s22, 2
      %s35 = sadd.s32 1, %s30
      %p36 = scmp.ge.s32.totalorder %s35, 2
      %s37 = scalar_select %p36, 0, %s35
      %s38 = sadd.s32 1, %s29
      %s39 = scalar_select %p36, %s38, %s29
      %p40 = scmp.ge.s32.totalorder %s39, 2
      %s41 = scalar_select %p40, 0, %s39
      %s42 = ssub.s32 %s29, %s41
      %s43 = ssub.s32 %s30, %s37
      %s44 = sor.u32 %s42, %s43
      %p45 = scmp.eq.s32.totalorder %s44, 0
      %s47 = sadd.s32 %s46, 1
      %s48 = scalar_select %p45, %s46, %s47
      %p51 = pneg %p45
      %p52 = scmp.eq.s32.totalorder %s22, 3
      %p53 = por %p51, %p52
      %p54 = scmp.ne.s32.totalorder %s46, %s49
      %p55 = scmp.eq.s32.totalorder %s22, 0
      %p56 = por %p54, %p55
      %p57 = scmp.ne.s32.totalorder %s46, %s49
      %p58 = scmp.eq.s32.totalorder %s27, 3
      %p59 = por %p57, %p58
      %p60 = scmp.ne.s32.totalorder %s49, %s50
      %p61 = scmp.eq.s32.totalorder %s27, 0
      %p62 = por %p60, %p61
      %p63 = scmp.ne.s32.totalorder %s49, %s50
      %p64 = scmp.eq.s32.totalorder %s28, 3
      %p65 = por %p63, %p64
      %p67 = scmp.ne.s32.totalorder %s50, %s66
      %p68 = scmp.eq.s32.totalorder %s28, 0
      %p69 = por %p67, %p68
      %s71 = sadd.s32 %s70, 1
      %p74 = scmp.eq.s32.totalorder %s22, 3
      %p75 = scmp.ne.s32.totalorder %s70, %s72
      %p76 = scmp.eq.s32.totalorder %s22, 0
      %p77 = por %p75, %p76
      %p78 = scmp.ne.s32.totalorder %s70, %s72
      %p79 = scmp.eq.s32.totalorder %s27, 3
      %p80 = por %p78, %p79
      %p81 = scmp.ne.s32.totalorder %s72, %s73
      %p82 = scmp.eq.s32.totalorder %s27, 0
      %p83 = por %p81, %p82
      %p84 = scmp.ne.s32.totalorder %s72, %s73
      %p85 = scmp.eq.s32.totalorder %s28, 3
      %p86 = por %p84, %p85
      %p88 = scmp.ne.s32.totalorder %s73, %s87
      %p89 = scmp.eq.s32.totalorder %s28, 0
      %p90 = por %p88, %p89
      %s91 = ssub.s32 %s29, %s41
      %s92 = ssub.s32 %s30, %s37
      %s93 = sor.u32 %s91, %s92
      %p94 = scmp.eq.s32.totalorder %s93, 0
      %s96 = sadd.s32 %s95, 1
      %s97 = scalar_select %p94, %s95, %s96
      %p100 = pneg %p94
      %p101 = scmp.eq.s32.totalorder %s22, 3
      %p102 = por %p100, %p101
      %p103 = scmp.ne.s32.totalorder %s95, %s98
      %p104 = scmp.eq.s32.totalorder %s22, 0
      %p105 = por %p103, %p104
      %p106 = scmp.ne.s32.totalorder %s95, %s98
      %p107 = scmp.eq.s32.totalorder %s27, 3
      %p108 = por %p106, %p107
      %p109 = scmp.ne.s32.totalorder %s98, %s99
      %p110 = scmp.eq.s32.totalorder %s27, 0
      %p111 = por %p109, %p110
      %p112 = scmp.ne.s32.totalorder %s98, %s99
      %p113 = scmp.eq.s32.totalorder %s28, 3
      %p114 = por %p112, %p113
      %p116 = scmp.ne.s32.totalorder %s99, %s115
      %p117 = scmp.eq.s32.totalorder %s28, 0
      %p118 = por %p116, %p117
      %s119 = ssub.s32 %s29, %s41
      %s120 = ssub.s32 %s30, %s37
      %s121 = sor.u32 %s119, %s120
      %p122 = scmp.eq.s32.totalorder %s121, 0
      %s124 = sadd.s32 %s123, 1
      %s125 = scalar_select %p122, %s123, %s124
      %p128 = pneg %p122
      %p129 = scmp.eq.s32.totalorder %s22, 3
      %p130 = por %p128, %p129
      %p131 = scmp.ne.s32.totalorder %s123, %s126
      %p132 = scmp.eq.s32.totalorder %s22, 0
      %p133 = por %p131, %p132
      %p134 = scmp.ne.s32.totalorder %s123, %s126
      %p135 = scmp.eq.s32.totalorder %s27, 3
      %p136 = por %p134, %p135
      %p137 = scmp.ne.s32.totalorder %s126, %s127
      %p138 = scmp.eq.s32.totalorder %s27, 0
      %p139 = por %p137, %p138
      %p140 = scmp.ne.s32.totalorder %s126, %s127
      %p141 = scmp.eq.s32.totalorder %s28, 3
      %p142 = por %p140, %p141
      %p144 = scmp.ne.s32.totalorder %s127, %s143
      %p145 = scmp.eq.s32.totalorder %s28, 0
      %p146 = por %p144, %p145
      %s147 = ssub.s32 %s29, %s41
      %s148 = ssub.s32 %s30, %s37
      %s149 = sor.u32 %s147, %s148
      %p150 = scmp.eq.s32.totalorder %s149, 0
      %s152 = sadd.s32 %s151, 1
      %s153 = scalar_select %p150, %s151, %s152
      %p156 = pneg %p150
      %p157 = scmp.eq.s32.totalorder %s22, 3
      %p158 = por %p156, %p157
      %p159 = scmp.ne.s32.totalorder %s151, %s154
      %p160 = scmp.eq.s32.totalorder %s22, 0
      %p161 = por %p159, %p160
      %p162 = scmp.ne.s32.totalorder %s151, %s154
      %p163 = scmp.eq.s32.totalorder %s27, 3
      %p164 = por %p162, %p163
      %p165 = scmp.ne.s32.totalorder %s154, %s155
      %p166 = scmp.eq.s32.totalorder %s27, 0
      %p167 = por %p165, %p166
      %p168 = scmp.ne.s32.totalorder %s154, %s155
      %p169 = scmp.eq.s32.totalorder %s28, 3
      %p170 = por %p168, %p169
      %p172 = scmp.ne.s32.totalorder %s155, %s171
      %p173 = scmp.eq.s32.totalorder %s28, 0
      %p174 = por %p172, %p173
      %s175 = ssub.s32 %s29, %s41
      %s176 = ssub.s32 %s30, %s37
      %s177 = sor.u32 %s175, %s176
      %p178 = scmp.eq.s32.totalorder %s177, 0
      %s180 = sadd.s32 %s179, 1
      %s181 = scalar_select %p178, %s179, %s180
      %p184 = pneg %p178
      %p185 = scmp.eq.s32.totalorder %s22, 3
      %p186 = por %p184, %p185
      %p187 = scmp.ne.s32.totalorder %s179, %s182
      %p188 = scmp.eq.s32.totalorder %s22, 0
      %p189 = por %p187, %p188
      %p190 = scmp.ne.s32.totalorder %s179, %s182
      %p191 = scmp.eq.s32.totalorder %s27, 3
      %p192 = por %p190, %p191
      %p193 = scmp.ne.s32.totalorder %s182, %s183
      %p194 = scmp.eq.s32.totalorder %s27, 0
      %p195 = por %p193, %p194
      %p196 = scmp.ne.s32.totalorder %s182, %s183
      %p197 = scmp.eq.s32.totalorder %s28, 3
      %p198 = por %p196, %p197
      %p200 = scmp.ne.s32.totalorder %s183, %s199
      %p201 = scmp.eq.s32.totalorder %s28, 0
      %p202 = por %p200, %p201
      %p203 = scmp.le.s32.totalorder 1, %s22
      %p204 = scmp.lt.s32.totalorder %s22, 5
      %p205 = pnand %p203, %p204
      %p206 = pneg %p205
      // Predicated region
      $region9: #{vector_quantizer_forward.1} parent=5 // pred_check
        _
      $region10: #{vector_quantizer_forward.1} parent=5 // pred_check_branch
        %208 = sbr.rel (%p205) target = $region12
      $region11: #{vector_quantizer_forward.1} parent=5 // pred_region
        %s209 = ssub.s32 %s22, 1
        // Predicated region
        $region13: #{vector_quantizer_forward.1} parent=11 // pred_check
          %p210 = pneg %p83
        $region14: #{vector_quantizer_forward.1} parent=11 // pred_check_branch
          %212 = sbr.rel (%p210) target = $region16
        $region15: #{vector_quantizer_forward.1} parent=11 // pred_region
          %214 = vsyncadd [#allocation6], 0
          %s215 = sshll.u32 %s1, 4
          %s216 = int_to_ptr.hbm [resolvable:$true] %s215
          %s217 = sshll.u32 [#allocation5], 4
          %s218 = int_to_ptr.vmem [resolvable:$true] %s217
          %223 = dma.hbm_to_vmem [thread:$0]  %s216, 256, %s218, [#allocation6], 128, 128, 8
        $region16: #{vector_quantizer_forward.1} parent=11 // pred_fallthru
          _
      $region12: #{vector_quantizer_forward.1} parent=5 // pred_fallthru
        _
      %p224 = scmp.lt.s32.totalorder %s22, 4
      // Predicated region
      $region17: #{vector_quantizer_forward.1} parent=5 // pred_check
        %p225 = pneg %p224
      $region18: #{vector_quantizer_forward.1} parent=5 // pred_check_branch
        %227 = sbr.rel (%p225) target = $region20
      $region19: #{vector_quantizer_forward.1} parent=5 // pred_region
        // Predicated region
        $region21: #{vector_quantizer_forward.1} parent=19 // pred_check
          %p228 = pneg %p56
        $region22: #{vector_quantizer_forward.1} parent=19 // pred_check_branch
          %230 = sbr.rel (%p228) target = $region24
        $region23: #{vector_quantizer_forward.1} parent=19 // pred_region
          %s231 = sand.u32 %s46, 1
          %s232 = scalar_lea.sflag [#allocation3], %s231
          %s233 = sand.u32 %s46, 1
          %s234 = smul.addr %s233, 32
          %s235 = scalar_lea.vmem [#allocation2], %s234
          %237 = vsyncadd %s232, 0
          %s238 = smul.addr %s29, 8
          %s239 = sadd.s32 %s30, %s238
          %s240 = smul.addr %s239, 8
          %s241 = scalar_lea.hbm %s0, %s240
          %s242 = sshll.u32 %s241, 4
          %s243 = int_to_ptr.hbm [resolvable:$true] %s242
          %s244 = sshll.u32 %s235, 4
          %s245 = int_to_ptr.vmem [resolvable:$true] %s244
          %250 = dma.hbm_to_vmem [thread:$0]  %s243, 512, %s245, %s232, 256, 128, 8
        $region24: #{vector_quantizer_forward.1} parent=19 // pred_fallthru
          _
      $region20: #{vector_quantizer_forward.1} parent=5 // pred_fallthru
        _
      %p251 = scmp.le.s32.totalorder 1, %s22
      %p252 = scmp.lt.s32.totalorder %s22, 5
      %p253 = pnand %p251, %p252
      %p254 = pneg %p253
      // Predicated region
      $region25: #{vector_quantizer_forward.1} parent=5 // pred_check
        _
      $region26: #{vector_quantizer_forward.1} parent=5 // pred_check_branch
        %256 = sbr.rel (%p253) target = $region28
      $region27: #{vector_quantizer_forward.1} parent=5 // pred_region
        %s257 = ssub.s32 %s22, 1
        %s258 = sand.u32 %s49, 1
        %s259 = scalar_lea.sflag [#allocation3], %s258
        %s260 = sand.u32 %s49, 1
        %s261 = smul.addr %s260, 32
        %s262 = scalar_lea.vmem [#allocation2], %s261
        // Predicated region
        $region29: #{vector_quantizer_forward.1} parent=27 // pred_check
          %p263 = pneg %p62
        $region30: #{vector_quantizer_forward.1} parent=27 // pred_check_branch
          %265 = sbr.rel (%p263) target = $region32
        $region31: #{vector_quantizer_forward.1} parent=27 // pred_region
          %267 = dma.done %s259, 512
        $region32: #{vector_quantizer_forward.1} parent=27 // pred_fallthru
          _
        // Predicated region
        $region33: #{vector_quantizer_forward.1} parent=27 // pred_check
          %p268 = pneg %p83
        $region34: #{vector_quantizer_forward.1} parent=27 // pred_check_branch
          %270 = sbr.rel (%p268) target = $region36
        $region35: #{vector_quantizer_forward.1} parent=27 // pred_region
          %272 = dma.done [#allocation6], 256
        $region36: #{vector_quantizer_forward.1} parent=27 // pred_fallthru
          _
        %s273 = sand.u32 %s49, 1
        %s274 = scalar_lea.sflag [#allocation3], %s273
        %s275 = sand.u32 %s49, 1
        %s276 = smul.addr %s275, 32
        %s277 = scalar_lea.vmem [#allocation2], %s276
        %p278 = pneg %p62
        %p279 = pneg %p59
        %p280 = pneg %p83
        %p281 = pneg %p80
        %p282 = pneg %p111
        %p283 = pneg %p108
        %s284 = sand.u32 %s98, 1
        %s285 = scalar_lea.sflag [#allocation4], %s284
        %s286 = sand.u32 %s98, 1
        %s287 = smul.addr %s286, 32
        %s288 = scalar_lea.vmem [#allocation7], %s287
        %p289 = pneg %p139
        %p290 = pneg %p136
        %p291 = scmp.lt.s32.totalorder %s31, 1
        %s292 = scalar_select %p291, %s31, 1
        %p293 = scmp.lt.s32.totalorder %s32, 1
        %s294 = scalar_select %p293, %s32, 1
        %s295 = smul.addr %s292, 2
        %s296 = sadd.s32 %s294, %s295
        %s297 = scalar_lea.vmem %s3, %s296
        %p298 = pneg %p167
        %p299 = pneg %p164
        %s300 = sand.u32 %s154, 1
        %s301 = scalar_lea.sflag [#allocation9], %s300
        %s302 = sand.u32 %s154, 1
        %s303 = smul.addr %s302, 16
        %s304 = scalar_lea.vmem [#allocation8], %s303
        %p305 = pneg %p195
        %p306 = pneg %p192
        %p307 = scmp.lt.s32.totalorder %s31, 1
        %s308 = scalar_select %p307, %s31, 1
        %p309 = scmp.lt.s32.totalorder %s32, 1
        %s310 = scalar_select %p309, %s32, 1
        %s311 = smul.addr %s308, 2
        %s312 = sadd.s32 %s310, %s311
        %s313 = scalar_lea.vmem %s5, %s312
        %p314 = scmp.lt.s32.totalorder %s31, 1
        %s315 = scalar_select %p314, %s31, 1
        %p316 = scmp.lt.s32.totalorder %s32, 1
        %s317 = scalar_select %p316, %s32, 1
        %s318 = smul.addr %s315, 2
        %s319 = sadd.s32 %s317, %s318
        %s320 = scalar_lea.vmem %s3, %s319
        %p321 = scmp.lt.s32.totalorder %s31, 1
        %s322 = scalar_select %p321, %s31, 1
        %p323 = scmp.lt.s32.totalorder %s32, 1
        %s324 = scalar_select %p323, %s32, 1
        %s325 = smul.addr %s322, 2
        %s326 = sadd.s32 %s324, %s325
        %s327 = scalar_lea.vmem %s5, %s326
        %v329 = vld [vmem:[%s262] sm:$0xff]
        %v330 = vld [vmem:[%s262 + $0x8] sm:$0xff]
        %v331 = vld [vmem:[%s262 + $0x10] sm:$0xff]
        %v332 = vld [vmem:[%s262 + $0x18] sm:$0xff]
        %v333 = vld [vmem:[#allocation5] sm:$0xff]
        %v334 = vld [vmem:[#allocation5 + $0x8] sm:$0xff]
        %v335 = vmul.f32 %v333, %v333
        %v336 = vmul.f32 %v334, %v334
        %vm337 = vcmask 261120
        %v338 = vsel %vm337, %v335, 0.0
        %339 = vadd.xlane.f32.xlu0 %v338
        %v340 = vpop.xlane.xlu0 %339
        %v341 = vsel %vm337, %v336, 0.0
        %342 = vadd.xlane.f32.xlu0 %v341
        %v343 = vpop.xlane.xlu0 %342
        %v344 = vpack.c.bf16 %v334, %v333
        %v345 = vpack.c.bf16 %v330, %v329
        %v346 = vpack.c.bf16 %v332, %v331
        %v348 = vsel %vm337, %v344, 0
        %350 = vmatpush.bf16.msra.mxu0 0
        %351 = vmatpush.bf16.msra.mxu0 0
        %352 = vmatpush.bf16.msra.mxu0 0
        %353 = vmatpush.bf16.msra.mxu0 0
        %354 = vmatpush.bf16.msra.mxu0 0
        %355 = vmatpush.bf16.msra.mxu0 0
        %356 = vmatpush.bf16.msra.mxu0 %v346
        %357 = vmatpush.bf16.msra.mxu0 %v345
        %358 = vmatmul.bf16.gmra.mxu0 %v348
        %v359 = vpop.f32.mrf.mxu0
        %v360 = vadd.f32 0.0, %v359
        %v361 = vpop.f32.mrf.mxu0
        %v362 = vadd.f32 0.0, %v361
        %363 = vdwg.mxu0
        %v364 = vmul.f32 %v360, 2.0
        %v365 = vmul.f32 %v362, 2.0
        %v366 = vsub.f32 %v340, %v364
        %v367 = vsub.f32 %v343, %v365
        %v368 = vmin.f32 %v366, %v367
        %v369 = vrot.slane %v368, 4
        %v370 = vmin.f32 %v368, %v369
        %v371 = vrot.slane %v370, 2
        %v372 = vmin.f32 %v370, %v371
        %v373 = vrot.slane %v372, 1
        %v374 = vmin.f32 %v372, %v373
        %v375 = vlaneseq
        %v376 = vshrl.u32 %v375, 7
        %v377 = vadd.s32 %v376, 8
        %vm378 = vcmp.eq.f32.partialorder %v366, %v374
        %vm379 = vcmp.eq.f32.partialorder %v367, %v374
        %v380 = vsel %vm378, %v376, 16
        %v381 = vsel %vm379, %v377, 16
        %vm382 = vcmp.lt.s32.totalorder %v380, %v381
        %v383 = vsel %vm382, %v380, %v381
        %v384 = vrot.slane %v383, 4
        %vm385 = vcmp.lt.s32.totalorder %v383, %v384
        %v386 = vsel %vm385, %v383, %v384
        %v387 = vrot.slane %v386, 2
        %vm388 = vcmp.lt.s32.totalorder %v386, %v387
        %v389 = vsel %vm388, %v386, %v387
        %v390 = vrot.slane %v389, 1
        %vm391 = vcmp.lt.s32.totalorder %v389, %v390
        %v392 = vsel %vm391, %v389, %v390
        %vm393 = vcmp.eq.s32.totalorder %v376, %v392
        %vm394 = vcmp.eq.s32.totalorder %v377, %v392
        %v395 = vsel %vm393, 1, 0
        %v396 = vsel %vm394, 1, 0
        %v397 = vcvt.s32.f32 %v395
        %v398 = vcvt.s32.f32 %v396
        %399 = vxpose.xlu0.b32.start [1/16] %v333, 128
        %400 = vxpose.xlu0.b32.cont [2/16] %v334, 128
        %401 = vxpose.xlu0.b32.cont [3/16] 0.0, 128
        %402 = vxpose.xlu0.b32.cont [4/16] 0.0, 128
        %403 = vxpose.xlu0.b32.cont [5/16] 0.0, 128
        %404 = vxpose.xlu0.b32.cont [6/16] 0.0, 128
        %405 = vxpose.xlu0.b32.cont [7/16] 0.0, 128
        %406 = vxpose.xlu0.b32.cont [8/16] 0.0, 128
        %407 = vxpose.xlu0.b32.cont [9/16] 0.0, 128
        %408 = vxpose.xlu0.b32.cont [10/16] 0.0, 128
        %409 = vxpose.xlu0.b32.cont [11/16] 0.0, 128
        %410 = vxpose.xlu0.b32.cont [12/16] 0.0, 128
        %411 = vxpose.xlu0.b32.cont [13/16] 0.0, 128
        %412 = vxpose.xlu0.b32.cont [14/16] 0.0, 128
        %413 = vxpose.xlu0.b32.cont [15/16] 0.0, 128
        %414 = vxpose.xlu0.b32.end [16/16] 0.0, 128
        %v415 = vpop.trf.xlu0
        %v416 = vpop.trf.xlu0
        %v417 = vpop.trf.xlu0
        %v418 = vpop.trf.xlu0
        %v419 = vpop.trf.xlu0
        %v420 = vpop.trf.xlu0
        %v421 = vpop.trf.xlu0
        %v422 = vpop.trf.xlu0
        %v423 = vpop.trf.xlu0
        %v424 = vpop.trf.xlu0
        %v425 = vpop.trf.xlu0
        %v426 = vpop.trf.xlu0
        %v427 = vpop.trf.xlu0
        %v428 = vpop.trf.xlu0
        %v429 = vpop.trf.xlu0
        %v430 = vpop.trf.xlu0
        %vm431 = vcmask 130048
        %v433 = vsel %vm431, %v415, 0
        %v436 = vsel %vm431, %v416, 0
        %v439 = vsel %vm431, %v417, 0
        %v442 = vsel %vm431, %v418, 0
        %444 = vmatpush.msra.mxu0 0.0
        %445 = vmatpush.msra.mxu0 0.0
        %446 = vmatpush.msra.mxu0 0.0
        %447 = vmatpush.msra.mxu0 0.0
        %448 = vmatpush.msra.mxu0 0.0
        %449 = vmatpush.msra.mxu0 0.0
        %450 = vmatpush.msra.mxu0 0.0
        %451 = vmatpush.msra.mxu0 0.0
        %452 = vmatpush.msra.mxu0 0.0
        %453 = vmatpush.msra.mxu0 0.0
        %454 = vmatpush.msra.mxu0 0.0
        %455 = vmatpush.msra.mxu0 0.0
        %456 = vmatpush.msra.mxu0 0.0
        %457 = vmatpush.msra.mxu0 0.0
        %458 = vmatpush.msra.mxu0 %v398
        %459 = vmatpush.msra.mxu0 %v397
        %460 = vmatmul.f32.gmra.mxu0 %v433
        %v461 = vpop.f32.mrf.mxu0
        %v462 = vadd.f32 0.0, %v461
        %463 = vmatmul.f32.gmra.mxu0 %v436
        %v464 = vpop.f32.mrf.mxu0
        %v465 = vadd.f32 0.0, %v464
        %466 = vmatmul.f32.gmra.mxu0 %v439
        %v467 = vpop.f32.mrf.mxu0
        %v468 = vadd.f32 0.0, %v467
        %469 = vmatmul.f32.gmra.mxu0 %v442
        %v470 = vpop.f32.mrf.mxu0
        %v471 = vadd.f32 0.0, %v470
        %472 = vdwg.mxu0
        %v473 = vsub.f32 %v462, %v329
        %v474 = vsub.f32 %v465, %v330
        %v475 = vsub.f32 %v468, %v331
        %v476 = vsub.f32 %v471, %v332
        %v477 = vmul.f32 %v473, %v473
        %v478 = vmul.f32 %v474, %v474
        %v479 = vmul.f32 %v475, %v475
        %v480 = vmul.f32 %v476, %v476
        %v481 = vadd.f32 %v477, %v478
        %v482 = vadd.f32 %v481, %v479
        %v483 = vadd.f32 %v482, %v480
        %v484 = vrot.slane %v483, 4
        %v485 = vadd.f32 %v483, %v484
        %v486 = vrot.slane %v485, 2
        %v487 = vadd.f32 %v485, %v486
        %v488 = vrot.slane %v487, 1
        %v489 = vadd.f32 %v487, %v488
        %490 = vadd.xlane.f32.xlu0 %v489
        %v491 = vpop.xlane.xlu0 %490
        %492 = vst [vmem:[%s288] sm:$0xff] %v462
        %493 = vst [vmem:[%s288 + $0x8] sm:$0xff] %v465
        %494 = vst [vmem:[%s288 + $0x10] sm:$0xff] %v468
        %495 = vst [vmem:[%s288 + $0x18] sm:$0xff] %v471
        %496 = vst [vmem:[%s320] sm:$0x1] %v392
        %vm497 = vcmask 0
        %498 = vst.msk [vmem:[%s327] sm:$0x1] %vm497, %v491
        %v499 = vmul.f32 %v329, %v329
        %v500 = vmul.f32 %v330, %v330
        %v501 = vmul.f32 %v331, %v331
        %v502 = vmul.f32 %v332, %v332
        %v503 = vadd.f32 %v499, %v500
        %v504 = vadd.f32 %v503, %v501
        %v505 = vadd.f32 %v504, %v502
        %v506 = vrot.slane %v505, 4
        %v507 = vadd.f32 %v505, %v506
        %v508 = vrot.slane %v507, 2
        %v509 = vadd.f32 %v507, %v508
        %v510 = vrot.slane %v509, 1
        %v511 = vadd.f32 %v509, %v510
        %v512 = vadd.f32 %v511, %v366
        %v513 = vadd.f32 %v511, %v367
        %v514 = vmax.f32 %v512, 0.0
        %v515 = vmax.f32 %v513, 0.0
        %v516 = vrsqrt.pop %v514
        %v517 = vmul.f32 %v516, %v514
        %v518 = vmul.f32 %v517, %v516
        %v519 = vmul.f32 0.5, %v518
        %v520 = vsub.f32 1.5, %v519
        %v521 = vmul.f32 %v516, %v520
        %v522 = vmul.f32 %v514, %v521
        %vm523 = vcmp.eq.f32.partialorder %v514, inf
        %v524 = vsel %vm523, %v514, %v522
        %vm525 = vcmp.eq.f32.partialorder %v514, 0.0
        %v526 = vand.u32 %v514, 2147483648
        %v527 = vsel %vm525, %v526, %v524
        %v528 = vrsqrt.pop %v515
        %v529 = vmul.f32 %v528, %v515
        %v530 = vmul.f32 %v529, %v528
        %v531 = vmul.f32 0.5, %v530
        %v532 = vsub.f32 1.5, %v531
        %v533 = vmul.f32 %v528, %v532
        %v534 = vmul.f32 %v515, %v533
        %vm535 = vcmp.eq.f32.partialorder %v515, inf
        %v536 = vsel %vm535, %v515, %v534
        %vm537 = vcmp.eq.f32.partialorder %v515, 0.0
        %v538 = vand.u32 %v515, 2147483648
        %v539 = vsel %vm537, %v538, %v536
        %v540 = vsub.f32 0.0, %v527
        %v541 = vsub.f32 0.0, %v539
        %542 = vst [vmem:[%s304] sm:$0xff] %v540
        %543 = vst [vmem:[%s304 + $0x8] sm:$0xff] %v541
        %s544 = sand.u32 %s98, 1
        %s545 = scalar_lea.sflag [#allocation4], %s544
        %s546 = sand.u32 %s98, 1
        %s547 = smul.addr %s546, 32
        %s548 = scalar_lea.vmem [#allocation7], %s547
        %p549 = scmp.lt.s32.totalorder %s31, 1
        %s550 = scalar_select %p549, %s31, 1
        %p551 = scmp.lt.s32.totalorder %s32, 1
        %s552 = scalar_select %p551, %s32, 1
        %s553 = smul.addr %s550, 2
        %s554 = sadd.s32 %s552, %s553
        %s555 = scalar_lea.vmem %s3, %s554
        %s556 = sand.u32 %s154, 1
        %s557 = scalar_lea.sflag [#allocation9], %s556
        %s558 = sand.u32 %s154, 1
        %s559 = smul.addr %s558, 16
        %s560 = scalar_lea.vmem [#allocation8], %s559
        %p561 = scmp.lt.s32.totalorder %s31, 1
        %s562 = scalar_select %p561, %s31, 1
        %p563 = scmp.lt.s32.totalorder %s32, 1
        %s564 = scalar_select %p563, %s32, 1
        %s565 = smul.addr %s562, 2
        %s566 = sadd.s32 %s564, %s565
        %s567 = scalar_lea.vmem %s5, %s566
        // Predicated region
        $region37: #{vector_quantizer_forward.1} parent=27 // pred_check
          %p568 = pneg %p108
        $region38: #{vector_quantizer_forward.1} parent=27 // pred_check_branch
          %570 = sbr.rel (%p568) target = $region40
        $region39: #{vector_quantizer_forward.1} parent=27 // pred_region
          %572 = vsyncadd %s545, 0
          %s573 = smul.addr %s31, 8
          %s574 = sadd.s32 %s32, %s573
          %s575 = smul.addr %s574, 8
          %s576 = scalar_lea.hbm %s2, %s575
          %s577 = sshll.u32 %s548, 4
          %s578 = int_to_ptr.vmem [resolvable:$true] %s577
          %s579 = sshll.u32 %s576, 4
          %s580 = int_to_ptr.hbm [resolvable:$true] %s579
          %585 = dma.vmem_to_hbm [thread:$0]  %s578, 512, %s580, %s545, 128, 256, 8
        $region40: #{vector_quantizer_forward.1} parent=27 // pred_fallthru
          _
        // Predicated region
        $region41: #{vector_quantizer_forward.1} parent=27 // pred_check
          %p586 = pneg %p136
        $region42: #{vector_quantizer_forward.1} parent=27 // pred_check_branch
          %588 = sbr.rel (%p586) target = $region44
        $region43: #{vector_quantizer_forward.1} parent=27 // pred_region
          _
        $region44: #{vector_quantizer_forward.1} parent=27 // pred_fallthru
          _
        // Predicated region
        $region45: #{vector_quantizer_forward.1} parent=27 // pred_check
          %p589 = pneg %p164
        $region46: #{vector_quantizer_forward.1} parent=27 // pred_check_branch
          %591 = sbr.rel (%p589) target = $region48
        $region47: #{vector_quantizer_forward.1} parent=27 // pred_region
          %593 = vsyncadd %s557, 0
          %s594 = smul.addr %s31, 4
          %s595 = sadd.s32 %s32, %s594
          %s596 = smul.addr %s595, 8
          %s597 = scalar_lea.hbm %s4, %s596
          %s598 = sshll.u32 %s560, 4
          %s599 = int_to_ptr.vmem [resolvable:$true] %s598
          %s600 = sshll.u32 %s597, 4
          %s601 = int_to_ptr.hbm [resolvable:$true] %s600
          %606 = dma.vmem_to_hbm [thread:$0]  %s599, 256, %s601, %s557, 128, 256, 8
        $region48: #{vector_quantizer_forward.1} parent=27 // pred_fallthru
          _
        // Predicated region
        $region49: #{vector_quantizer_forward.1} parent=27 // pred_check
          %p607 = pneg %p192
        $region50: #{vector_quantizer_forward.1} parent=27 // pred_check_branch
          %609 = sbr.rel (%p607) target = $region52
        $region51: #{vector_quantizer_forward.1} parent=27 // pred_region
          _
        $region52: #{vector_quantizer_forward.1} parent=27 // pred_fallthru
          _
      $region28: #{vector_quantizer_forward.1} parent=5 // pred_fallthru
        _
      %p610 = scmp.le.s32.totalorder 2, %s22
      // Predicated region
      $region53: #{vector_quantizer_forward.1} parent=5 // pred_check
        %p611 = pneg %p610
      $region54: #{vector_quantizer_forward.1} parent=5 // pred_check_branch
        %613 = sbr.rel (%p611) target = $region56
      $region55: #{vector_quantizer_forward.1} parent=5 // pred_region
        %s614 = ssub.s32 %s22, 2
        // Predicated region
        $region57: #{vector_quantizer_forward.1} parent=55 // pred_check
          %p615 = pneg %p114
        $region58: #{vector_quantizer_forward.1} parent=55 // pred_check_branch
          %617 = sbr.rel (%p615) target = $region60
        $region59: #{vector_quantizer_forward.1} parent=55 // pred_region
          %s618 = sand.u32 %s99, 1
          %s619 = scalar_lea.sflag [#allocation4], %s618
          %s620 = sand.u32 %s99, 1
          %s621 = smul.addr %s620, 32
          %s622 = scalar_lea.vmem [#allocation7], %s621
          %624 = dma.done %s619, 512
        $region60: #{vector_quantizer_forward.1} parent=55 // pred_fallthru
          _
        // Predicated region
        $region61: #{vector_quantizer_forward.1} parent=55 // pred_check
          %p625 = pneg %p142
        $region62: #{vector_quantizer_forward.1} parent=55 // pred_check_branch
          %627 = sbr.rel (%p625) target = $region64
        $region63: #{vector_quantizer_forward.1} parent=55 // pred_region
          %p628 = scmp.lt.s32.totalorder %s33, 1
          %s629 = scalar_select %p628, %s33, 1
          %p630 = scmp.lt.s32.totalorder %s34, 1
          %s631 = scalar_select %p630, %s34, 1
          %s632 = smul.addr %s629, 2
          %s633 = sadd.s32 %s631, %s632
          %s634 = scalar_lea.vmem %s3, %s633
        $region64: #{vector_quantizer_forward.1} parent=55 // pred_fallthru
          _
        // Predicated region
        $region65: #{vector_quantizer_forward.1} parent=55 // pred_check
          %p635 = pneg %p170
        $region66: #{vector_quantizer_forward.1} parent=55 // pred_check_branch
          %637 = sbr.rel (%p635) target = $region68
        $region67: #{vector_quantizer_forward.1} parent=55 // pred_region
          %s638 = sand.u32 %s155, 1
          %s639 = scalar_lea.sflag [#allocation9], %s638
          %s640 = sand.u32 %s155, 1
          %s641 = smul.addr %s640, 16
          %s642 = scalar_lea.vmem [#allocation8], %s641
          %644 = dma.done %s639, 256
        $region68: #{vector_quantizer_forward.1} parent=55 // pred_fallthru
          _
        // Predicated region
        $region69: #{vector_quantizer_forward.1} parent=55 // pred_check
          %p645 = pneg %p198
        $region70: #{vector_quantizer_forward.1} parent=55 // pred_check_branch
          %647 = sbr.rel (%p645) target = $region72
        $region71: #{vector_quantizer_forward.1} parent=55 // pred_region
          %p648 = scmp.lt.s32.totalorder %s33, 1
          %s649 = scalar_select %p648, %s33, 1
          %p650 = scmp.lt.s32.totalorder %s34, 1
          %s651 = scalar_select %p650, %s34, 1
          %s652 = smul.addr %s649, 2
          %s653 = sadd.s32 %s651, %s652
          %s654 = scalar_lea.vmem %s5, %s653
        $region72: #{vector_quantizer_forward.1} parent=55 // pred_fallthru
          _
      $region56: #{vector_quantizer_forward.1} parent=5 // pred_fallthru
        _
    $region6: #{vector_quantizer_forward.1} parent=1 // loop_footer
      %s26 = sadd.s32 1, %s22
    $region7: #{vector_quantizer_forward.1} parent=1 // loop_footer_branch
      %21 = sbr.rel target = $region3
    $region8: #{vector_quantizer_forward.1} parent=1 // loop_exit
      _
    %655 = vsyncpa [#allocation3], 1
    %s656 = scalar_lea.sflag [#allocation3], 1
    %657 = vsyncpa %s656, 1
    %658 = vsyncpa [#allocation6], 1
    %659 = vsyncpa [#allocation4], 1
    %s660 = scalar_lea.sflag [#allocation4], 1
    %661 = vsyncpa %s660, 1
    %662 = vsyncpa [#allocation9], 1
    %s663 = scalar_lea.sflag [#allocation9], 1
    %664 = vsyncpa %s663, 1

</llo_original>
